<compile_context>
chip_gen: v5e
topology: v5e:2x2
jax: 0.10.0
libtpu: 0.0.40
codegen_flags: <defaults>
</compile_context>

<pallas_src>
import functools

import numpy as np

import jax
import jax.numpy as jnp
from jax import lax
from jax.experimental import pallas as pl
from jax.experimental.pallas import tpu as pltpu


def _dkt_loss_kernel(pred_ref, qnext_ref, anext_ref, p_ref, mask_ref, loss_ref):
    """Batched-over-students DKT loss kernel.

    pred_ref : (Bb, T, Q)  model probabilities (native dtype, e.g. bf16 or f32)
    qnext_ref: (Bb, T)     question id answered at step t+1 (-1 for padding / last step)
    anext_ref: (Bb, T)     label for step t+1 (0 at padding / last step)
    """
    Bb, T, Q = pred_ref.shape
    Tm1 = T - 1

    pred = pred_ref[...]                     # keep native dtype; select picks one value per row
    qnext = qnext_ref[...]                   # (Bb, T) int32
    a = anext_ref[...]                       # (Bb, T) f32

    # p[b, t] = pred[b, t, qnext[b, t]] (0 for padding / last step): one select + lane reduce.
    # Exact in any dtype because at most one element per (b, t) row is nonzero.
    iota_q = lax.broadcasted_iota(jnp.int32, (Bb, T, Q), 2)
    sel = jnp.where(iota_q == qnext[..., None], pred, jnp.zeros_like(pred))
    p = jnp.sum(sel, axis=-1).astype(jnp.float32)                  # (Bb, T)

    # Truncation rule from the reference: keep indices <= last index with p > 0;
    # keep the first T-1 steps if there is no positive element.  Column T-1 (the extra
    # padded step) is therefore always masked out.
    idx = lax.broadcasted_iota(jnp.int32, (Bb, T), 1)
    last_pos = jnp.max(jnp.where(p > 0.0, idx, -1), axis=1, keepdims=True)     # (Bb, 1)
    keep_len = jnp.where(last_pos >= 0, last_pos + 1, Tm1)                     # (Bb, 1)
    mask = (idx < keep_len).astype(jnp.float32)                                # (Bb, T)

    # torch.nn.BCELoss semantics: clamp log at -100 BEFORE multiplying by a / (1-a),
    # so a == 0 with p == 0 contributes 0 (not NaN).
    log_p = jnp.maximum(jnp.log(p), -100.0)
    log_1mp = jnp.maximum(jnp.log(1.0 - p), -100.0)
    bce = -(a * log_p + (1.0 - a) * log_1mp)                       # (Bb, T)
    num = jnp.sum(bce * mask, axis=1, keepdims=True)               # (Bb, 1)
    den = jnp.sum(mask, axis=1, keepdims=True)                     # (Bb, 1), always >= 1
    loss = num / den   # exact divide: den is a tiny count; approx reciprocal not worth the risk

    p_ref[...] = p
    mask_ref[...] = mask
    loss_ref[...] = loss


def _choose_block_and_vmem(B, T, Q, itemsize):
    """Pick the student-block size and an explicit VMEM limit.

    Targets ~4-8 MiB of pred per grid step (so the ~0.35us per-step overhead is <10% of
    the DMA time), caps the footprint (double-buffered pred tile + in-kernel temporaries)
    at ~70% of this generation's VMEM (64 MiB on v7x, 128 MiB on v5e/v6e), and keeps the
    grid extent >= 2 (>= 4 on small-VMEM 2-TensorCore chips) whenever B allows it so the
    pipeline overlaps and dimension_semantics=("parallel",) can shard across cores.
    """
    try:
        cap = int(getattr(pltpu.get_tpu_info(), "vmem_capacity_bytes", 128 << 20))
    except Exception:  # hardware query unavailable (e.g. interpret mode)
        cap = 128 << 20
    budget = int(cap * 0.70)

    pred_row = T * Q * itemsize                       # one student's pred tile
    # working set per student: pred tile double-buffered (2x) + select temp (native dtype)
    # + iota/compare temp (int32) + small per-row vectors
    work_row = T * Q * (3 * itemsize + 4) + 16 * T

    tgt_pred_bytes = (8 << 20) if cap >= (96 << 20) else (4 << 20)
    blk = min(tgt_pred_bytes // max(pred_row, 1), budget // max(work_row, 1))

    # Keep enough grid steps for pipelining / TensorCore sharding.
    min_blocks = 4 if cap < (96 << 20) else 2
    if B >= 8 * min_blocks:
        blk = min(blk, -(-B // min_blocks))

    blk = int(max(8, min(blk, ((B + 7) // 8) * 8)))
    blk -= blk % 8
    blk = max(blk, 8)

    vmem_limit = int(min(cap * 0.9, max(32 << 20, work_row * blk * 1.25 + (4 << 20))))
    return blk, vmem_limit


@functools.partial(jax.jit, static_argnames=("num_of_questions", "max_step", "b_blk"))
def dkt_loss_pallas(pred, batch, *, num_of_questions, max_step, b_blk=None):
    """Runs the Pallas kernel. Returns fixed-shape per-student p, a, keep-mask, loss."""
    B, T, Q = pred.shape
    assert T == max_step and Q == num_of_questions
    assert batch.shape == (B, T, 2 * Q)
    Tm1 = T - 1

    # Compress the one-hot interaction encoding ONCE outside the kernel so the kernel's
    # HBM traffic is essentially pred only.
    # NOTE: assumes each interaction row is one-hot (multi-hot rows would diverge from
    # the reference matmul, which would sum the matched predictions).
    # TODO(synk): feed question-id / correctness directly from the loader to drop this pass.
    corr = batch[..., :Q].astype(jnp.float32)
    wrong = batch[..., Q:].astype(jnp.float32)
    delta = corr + wrong
    answered = jnp.sum(delta, axis=-1) > 0.5
    qid = jnp.argmax(delta, axis=-1).astype(jnp.int32)
    qcode = jnp.where(answered, qid, -1).astype(jnp.int32)                  # (B, T)
    label = jnp.floor((jnp.sum(corr - wrong, axis=-1) + 1.0) * 0.5)         # (B, T), ref formula

    # Shift by one step and pad the last column so the kernel never slices pred's time axis.
    qnext = jnp.concatenate([qcode[:, 1:], jnp.full((B, 1), -1, jnp.int32)], axis=1)   # (B, T)
    anext = jnp.concatenate(
        [label[:, 1:], jnp.zeros((B, 1), label.dtype)], axis=1).astype(jnp.float32)    # (B, T)

    if b_blk is None:
        b_blk, vmem_limit = _choose_block_and_vmem(B, T, Q, jnp.dtype(pred.dtype).itemsize)
    else:
        _, vmem_limit = _choose_block_and_vmem(B, T, Q, jnp.dtype(pred.dtype).itemsize)
    B_pad = ((B + b_blk - 1) // b_blk) * b_blk

    pred_k, qnext_k, anext_k = pred, qnext, anext
    if B_pad != B:
        padn = B_pad - B
        pred_k = jnp.pad(pred_k, ((0, padn), (0, 0), (0, 0)))
        qnext_k = jnp.pad(qnext_k, ((0, padn), (0, 0)), constant_values=-1)  # padding -> p = 0
        anext_k = jnp.pad(anext_k, ((0, padn), (0, 0)))

    out_shape = (
        jax.ShapeDtypeStruct((B_pad, T), jnp.float32),   # p (last column always 0)
        jax.ShapeDtypeStruct((B_pad, T), jnp.float32),   # keep mask (last column always 0)
        jax.ShapeDtypeStruct((B_pad, 1), jnp.float32),   # per-student BCE mean
    )
    grid_spec = pltpu.PrefetchScalarGridSpec(
        num_scalar_prefetch=0,
        grid=(B_pad // b_blk,),
        in_specs=[
            pl.BlockSpec((b_blk, T, Q), lambda s: (s, 0, 0)),
            pl.BlockSpec((b_blk, T), lambda s: (s, 0)),
            pl.BlockSpec((b_blk, T), lambda s: (s, 0)),
        ],
        out_specs=[
            pl.BlockSpec((b_blk, T), lambda s: (s, 0)),
            pl.BlockSpec((b_blk, T), lambda s: (s, 0)),
            pl.BlockSpec((b_blk, 1), lambda s: (s, 0)),
        ],
    )
    p, mask, loss = pl.pallas_call(
        _dkt_loss_kernel,
        out_shape=out_shape,
        grid_spec=grid_spec,
        compiler_params=pltpu.CompilerParams(
            dimension_semantics=("parallel",),
            vmem_limit_bytes=vmem_limit),
    )(pred_k, qnext_k, anext_k)
    return p[:B, :Tm1], anext[:B, :Tm1], mask[:B, :Tm1], loss[:B, 0]


def loss_func_forward(pred, batch, num_of_questions, max_step):
    """Mirror of lossFunc.forward: returns (loss, prediction, ground_truth)."""
    p, a, mask, per_loss = jax.block_until_ready(
        dkt_loss_pallas(pred, batch, num_of_questions=num_of_questions, max_step=max_step))
    p = np.asarray(p)
    a = np.asarray(a)
    keep = np.asarray(mask) > 0.5
    loss = float(np.asarray(per_loss).sum())
    # Vectorized truncation + concat: numpy row-major boolean select preserves the
    # (student-major, time-ascending) order of the reference torch.cat loop.
    prediction = p[keep]
    ground_truth = a[keep]
    return loss, prediction, ground_truth


def _reference_forward(pred, batch, Q, T):
    """Pure numpy re-implementation of the torch module (for correctness check)."""
    pred = np.asarray(pred, np.float64)
    batch = np.asarray(batch, np.float64)
    loss = 0.0
    preds, gts = [], []
    for s in range(pred.shape[0]):
        delta = batch[s][:, :Q] + batch[s][:, Q:]
        temp = pred[s][:T - 1] @ delta[1:].T
        p = np.diagonal(temp).copy()
        a = np.floor(((batch[s][:, :Q] - batch[s][:, Q:]).sum(1) + 1) / 2)[1:]
        for i in range(len(p) - 1, -1, -1):
            if p[i] > 0:
                p = p[:i + 1]
                a = a[:i + 1]
                break
        with np.errstate(divide="ignore"):
            log_p = np.maximum(np.log(p), -100.0)
            log_1mp = np.maximum(np.log(1.0 - p), -100.0)
        bce = -(a * log_p + (1.0 - a) * log_1mp)
        loss += bce.mean()
        preds.append(p)
        gts.append(a)
    return loss, np.concatenate(preds), np.concatenate(gts)


if __name__ == "__main__":
    B = 3                 # students
    MAX_STEP = 8          # time steps
    NUM_Q = 32            # number of questions

    key = jax.random.PRNGKey(0)
    k_pred, k_q, k_c = jax.random.split(key, 3)

    # pred = model output, probabilities in (0, 1)
    pred = jax.nn.sigmoid(jax.random.normal(k_pred, (B, MAX_STEP, NUM_Q), jnp.float32))

    # Valid one-hot interaction batch; students 1/2 have trailing padding (student 2 is all
    # padding) so the data-dependent truncation path is exercised.
    qids = np.asarray(jax.random.randint(k_q, (B, MAX_STEP), 0, NUM_Q))
    correct = np.asarray(jax.random.bernoulli(k_c, 0.6, (B, MAX_STEP)))
    lengths = [MAX_STEP, 5, 0]
    batch_np = np.zeros((B, MAX_STEP, 2 * NUM_Q), np.float32)
    for s in range(B):
        for t in range(lengths[s]):
            q = int(qids[s, t])
            if correct[s, t]:
                batch_np[s, t, q] = 1.0
            else:
                batch_np[s, t, NUM_Q + q] = 1.0
    batch = jnp.asarray(batch_np)

    loss, prediction, ground_truth = loss_func_forward(pred, batch, NUM_Q, MAX_STEP)

    ref_loss, ref_pred, ref_gt = _reference_forward(np.asarray(pred), batch_np, NUM_Q, MAX_STEP)

    assert prediction.shape == ref_pred.shape, (prediction.shape, ref_pred.shape)
    assert ground_truth.shape == ref_gt.shape, (ground_truth.shape, ref_gt.shape)
    assert np.allclose(prediction, ref_pred, rtol=1e-4, atol=1e-5)
    assert np.allclose(ground_truth, ref_gt, rtol=1e-4, atol=1e-5)
    assert np.allclose(loss, ref_loss, rtol=1e-4, atol=1e-4)

    print("KERNEL_OK")
</pallas_src>

<mosaic_0001>
module attributes {stable_mosaic.version = 11 : i64} {
  func.func @_dkt_loss_kernel(%arg0: i32, %arg1: memref<8x8x32xf32, #tpu.memory_space<vmem>>, %arg2: memref<8x8xi32, #tpu.memory_space<vmem>>, %arg3: memref<8x8xf32, #tpu.memory_space<vmem>>, %arg4: memref<8x8xf32, #tpu.memory_space<vmem>>, %arg5: memref<8x8xf32, #tpu.memory_space<vmem>>, %arg6: memref<8x1xf32, #tpu.memory_space<vmem>>) attributes {dimension_semantics = [#tpu.dimension_semantics<parallel>], iteration_bounds = array<i64: 1>, scalar_prefetch = 0 : i64, scratch_operands = 0 : i64, tpu.core_type = #tpu.core_type<tc>, window_params = [{transform_indices = @transform_0, window_bounds = array<i64: 8, 8, 32>}, {transform_indices = @transform_1, window_bounds = array<i64: 8, 8>}, {transform_indices = @transform_2, window_bounds = array<i64: 8, 8>}, {transform_indices = @transform_3, window_bounds = array<i64: 8, 8>}, {transform_indices = @transform_4, window_bounds = array<i64: 8, 8>}, {transform_indices = @transform_5, window_bounds = array<i64: 8, 1>}]} {
    %c0 = arith.constant 0 : index
    %c0_0 = arith.constant 0 : index
    %c0_1 = arith.constant 0 : index
    %0 = vector.load %arg1[%c0, %c0_0, %c0_1] : memref<8x8x32xf32, #tpu.memory_space<vmem>>, vector<8x8x32xf32>
    %c0_2 = arith.constant 0 : index
    %c0_3 = arith.constant 0 : index
    %1 = vector.load %arg2[%c0_2, %c0_3] : memref<8x8xi32, #tpu.memory_space<vmem>>, vector<8x8xi32>
    %c0_4 = arith.constant 0 : index
    %c0_5 = arith.constant 0 : index
    %2 = vector.load %arg3[%c0_4, %c0_5] : memref<8x8xf32, #tpu.memory_space<vmem>>, vector<8x8xf32>
    %3 = tpu.iota {dimensions = array<i32: 2>} : vector<8x8x32xi32>
    %4 = vector.shape_cast %1 : vector<8x8xi32> to vector<8x8x1xi32>
    %5 = vector.broadcast %4 : vector<8x8x1xi32> to vector<8x8x32xi32>
    %6 = arith.cmpi eq, %3, %5 : vector<8x8x32xi32>
    %cst = arith.constant 0.000000e+00 : f32
    %7 = vector.broadcast %cst : f32 to vector<8x8x32xf32>
    %8 = arith.select %6, %0, %7 : vector<8x8x32xi1>, vector<8x8x32xf32>
    %cst_6 = arith.constant dense<0.000000e+00> : vector<8x8xf32>
    %9 = vector.multi_reduction <add>, %8, %cst_6 [2] : vector<8x8x32xf32> to vector<8x8xf32>
    %10 = tpu.iota {dimensions = array<i32: 1>} : vector<8x8xi32>
    %cst_7 = arith.constant 0.000000e+00 : f32
    %11 = vector.broadcast %cst_7 : f32 to vector<8x8xf32>
    %12 = arith.cmpf ogt, %9, %11 : vector<8x8xf32>
    %c-1_i32 = arith.constant -1 : i32
    %13 = vector.broadcast %c-1_i32 : i32 to vector<8x8xi32>
    %14 = arith.select %12, %10, %13 : vector<8x8xi1>, vector<8x8xi32>
    %cst_8 = arith.constant dense<-2147483648> : vector<8xi32>
    %15 = vector.multi_reduction <maxsi>, %14, %cst_8 [1] : vector<8x8xi32> to vector<8xi32>
    %16 = vector.shape_cast %15 : vector<8xi32> to vector<8x1xi32>
    %c0_i32 = arith.constant 0 : i32
    %17 = vector.broadcast %c0_i32 : i32 to vector<8x1xi32>
    %18 = arith.cmpi sge, %16, %17 : vector<8x1xi32>
    %c1_i32 = arith.constant 1 : i32
    %19 = vector.broadcast %c1_i32 : i32 to vector<8x1xi32>
    %20 = arith.addi %16, %19 : vector<8x1xi32>
    %c7_i32 = arith.constant 7 : i32
    %21 = vector.broadcast %c7_i32 : i32 to vector<8x1xi32>
    %22 = arith.select %18, %20, %21 : vector<8x1xi1>, vector<8x1xi32>
    %23 = vector.broadcast %22 : vector<8x1xi32> to vector<8x8xi32>
    %24 = arith.cmpi slt, %10, %23 : vector<8x8xi32>
    %25 = arith.extui %24 : vector<8x8xi1> to vector<8x8xi32>
    %26 = arith.sitofp %25 : vector<8x8xi32> to vector<8x8xf32>
    %27 = math.log %9 : vector<8x8xf32>
    %cst_9 = arith.constant -1.000000e+02 : f32
    %28 = vector.broadcast %cst_9 : f32 to vector<8x8xf32>
    %29 = arith.maximumf %27, %28 : vector<8x8xf32>
    %cst_10 = arith.constant 1.000000e+00 : f32
    %30 = vector.broadcast %cst_10 : f32 to vector<8x8xf32>
    %31 = arith.subf %30, %9 : vector<8x8xf32>
    %32 = math.log %31 : vector<8x8xf32>
    %cst_11 = arith.constant -1.000000e+02 : f32
    %33 = vector.broadcast %cst_11 : f32 to vector<8x8xf32>
    %34 = arith.maximumf %32, %33 : vector<8x8xf32>
    %35 = arith.mulf %2, %29 : vector<8x8xf32>
    %cst_12 = arith.constant 1.000000e+00 : f32
    %36 = vector.broadcast %cst_12 : f32 to vector<8x8xf32>
    %37 = arith.subf %36, %2 : vector<8x8xf32>
    %38 = arith.mulf %37, %34 : vector<8x8xf32>
    %39 = arith.addf %35, %38 : vector<8x8xf32>
    %cst_13 = arith.constant 0.000000e+00 : f32
    %40 = vector.broadcast %cst_13 : f32 to vector<8x8xf32>
    %41 = arith.subf %40, %39 : vector<8x8xf32>
    %42 = arith.mulf %41, %26 : vector<8x8xf32>
    %cst_14 = arith.constant dense<0.000000e+00> : vector<8xf32>
    %43 = vector.multi_reduction <add>, %42, %cst_14 [1] : vector<8x8xf32> to vector<8xf32>
    %44 = vector.shape_cast %43 : vector<8xf32> to vector<8x1xf32>
    %cst_15 = arith.constant dense<0.000000e+00> : vector<8xf32>
    %45 = vector.multi_reduction <add>, %26, %cst_15 [1] : vector<8x8xf32> to vector<8xf32>
    %46 = vector.shape_cast %45 : vector<8xf32> to vector<8x1xf32>
    %47 = arith.divf %44, %46 : vector<8x1xf32>
    %c0_16 = arith.constant 0 : index
    %c0_17 = arith.constant 0 : index
    %48 = vector.load %arg4[%c0_16, %c0_17] : memref<8x8xf32, #tpu.memory_space<vmem>>, vector<8x8xf32>
    tpu.vector_store %arg4[%c0_16, %c0_17], %9 {strides = array<i32>} : memref<8x8xf32, #tpu.memory_space<vmem>>, vector<8x8xf32>,
    %c0_18 = arith.constant 0 : index
    %c0_19 = arith.constant 0 : index
    %49 = vector.load %arg5[%c0_18, %c0_19] : memref<8x8xf32, #tpu.memory_space<vmem>>, vector<8x8xf32>
    tpu.vector_store %arg5[%c0_18, %c0_19], %26 {strides = array<i32>} : memref<8x8xf32, #tpu.memory_space<vmem>>, vector<8x8xf32>,
    %c0_20 = arith.constant 0 : index
    %c0_21 = arith.constant 0 : index
    %50 = vector.load %arg6[%c0_20, %c0_21] : memref<8x1xf32, #tpu.memory_space<vmem>>, vector<8x1xf32>
    tpu.vector_store %arg6[%c0_20, %c0_21], %47 {strides = array<i32>} : memref<8x1xf32, #tpu.memory_space<vmem>>, vector<8x1xf32>,
    return
  }
  func.func @transform_0(%arg0: i32) -> (i32, i32, i32) {
    %c0_i32 = arith.constant 0 : i32
    %c0_i32_0 = arith.constant 0 : i32
    %c0_i32_1 = arith.constant 0 : i32
    return %arg0, %c0_i32, %c0_i32_0 : i32, i32, i32
  }
  func.func @transform_1(%arg0: i32) -> (i32, i32) {
    %c0_i32 = arith.constant 0 : i32
    %c0_i32_0 = arith.constant 0 : i32
    return %arg0, %c0_i32 : i32, i32
  }
  func.func @transform_2(%arg0: i32) -> (i32, i32) {
    %c0_i32 = arith.constant 0 : i32
    %c0_i32_0 = arith.constant 0 : i32
    return %arg0, %c0_i32 : i32, i32
  }
  func.func @transform_3(%arg0: i32) -> (i32, i32) {
    %c0_i32 = arith.constant 0 : i32
    %c0_i32_0 = arith.constant 0 : i32
    return %arg0, %c0_i32 : i32, i32
  }
  func.func @transform_4(%arg0: i32) -> (i32, i32) {
    %c0_i32 = arith.constant 0 : i32
    %c0_i32_0 = arith.constant 0 : i32
    return %arg0, %c0_i32 : i32, i32
  }
  func.func @transform_5(%arg0: i32) -> (i32, i32) {
    %c0_i32 = arith.constant 0 : i32
    %c0_i32_0 = arith.constant 0 : i32
    return %arg0, %c0_i32 : i32, i32
  }
}

</mosaic_0001>

<llo_original>
// kernel: dkt_loss_pallas.1
$region0: #{dkt_loss_pallas.1}
  #allocation0 [shape = 'u32[]', space=smem, size = 0x4, offset = 0x4, fixed_abs, tag = 'smem constant byte address 0x4 - core index']
  #allocation1 [shape = 'u32[72,128]{1,0:T(1,128)}', space=vmem, size = 0x9000, scoped, tag = 'internal scratch']
  %s0 = inlined_call_operand.vmem [shape: f32[8,8,32], index: 0, kind: input, shape index: {}]
  %s1 = inlined_call_operand.vmem [shape: s32[8,8], index: 1, kind: input, shape index: {}]
  %s2 = inlined_call_operand.vmem [shape: f32[8,8], index: 2, kind: input, shape index: {}]
  %s3 = inlined_call_operand.vmem [shape: f32[8,8], index: 3, kind: output, shape index: {0}]
  %s4 = inlined_call_operand.vmem [shape: f32[8,8], index: 4, kind: output, shape index: {1}]
  %s5 = inlined_call_operand.vmem [shape: f32[8,1], index: 5, kind: output, shape index: {2}]
  %6 = xla_tuple %s3, %s4, %s5
  %s7 = sld [smem:[#allocation0]]
  $region38: #{dkt_loss_pallas.1} parent=0
    _
  %s9 = ssub.s32 1, %s7
  %s10 = scalar_select 0, %s9, %s7
  // Predicated region
  $region2: #{dkt_loss_pallas.1} parent=0 // pred_check
    _
  $region3: #{dkt_loss_pallas.1} parent=0 // pred_check_branch
    %12 = sbr.rel (0) target = $region5
  $region4: #{dkt_loss_pallas.1} parent=0 // pred_region
    _
  $region5: #{dkt_loss_pallas.1} parent=0 // pred_fallthru
    _
  // Predicated region
  $region6: #{dkt_loss_pallas.1} parent=0 // pred_check
    _
  $region7: #{dkt_loss_pallas.1} parent=0 // pred_check_branch
    %14 = sbr.rel (0) target = $region9
  $region8: #{dkt_loss_pallas.1} parent=0 // pred_region
    _
  $region9: #{dkt_loss_pallas.1} parent=0 // pred_fallthru
    _
  // Predicated region
  $region10: #{dkt_loss_pallas.1} parent=0 // pred_check
    _
  $region11: #{dkt_loss_pallas.1} parent=0 // pred_check_branch
    %16 = sbr.rel (0) target = $region13
  $region12: #{dkt_loss_pallas.1} parent=0 // pred_region
    _
  $region13: #{dkt_loss_pallas.1} parent=0 // pred_fallthru
    _
  %v17 = vld [vmem:[%s0] sm:$0xff]
  %v18 = vld [vmem:[%s0 + $0x8] sm:$0xff]
  %v19 = vld [vmem:[%s0 + $0x10] sm:$0xff]
  %v20 = vld [vmem:[%s0 + $0x18] sm:$0xff]
  %v21 = vld [vmem:[%s0 + $0x20] sm:$0xff]
  %v22 = vld [vmem:[%s0 + $0x28] sm:$0xff]
  %v23 = vld [vmem:[%s0 + $0x30] sm:$0xff]
  %v24 = vld [vmem:[%s0 + $0x38] sm:$0xff]
  %v25 = vld [vmem:[%s1] sm:$0xff]
  %v26 = vld [vmem:[%s2] sm:$0xff]
  %v27 = vlaneseq
  %v28 = vand.u32 %v27, 127
  %v29 = vperm.slane %v25, 0
  %v30 = vlaneseq
  %v31 = vshrl.u32 %v30, 7
  %33 = vset.pattern.permute.xlu0 %v31
  %34 = vperm.xlu0 %33, %v29
  %v35 = vpop.permute.xlu0 %34
  %v36 = vperm.slane %v25, 1
  %v37 = vlaneseq
  %v38 = vshrl.u32 %v37, 7
  %40 = vset.pattern.permute.xlu0 %v38
  %41 = vperm.xlu0 %40, %v36
  %v42 = vpop.permute.xlu0 %41
  %v43 = vperm.slane %v25, 2
  %v44 = vlaneseq
  %v45 = vshrl.u32 %v44, 7
  %47 = vset.pattern.permute.xlu0 %v45
  %48 = vperm.xlu0 %47, %v43
  %v49 = vpop.permute.xlu0 %48
  %v50 = vperm.slane %v25, 3
  %v51 = vlaneseq
  %v52 = vshrl.u32 %v51, 7
  %54 = vset.pattern.permute.xlu0 %v52
  %55 = vperm.xlu0 %54, %v50
  %v56 = vpop.permute.xlu0 %55
  %v57 = vperm.slane %v25, 4
  %v58 = vlaneseq
  %v59 = vshrl.u32 %v58, 7
  %61 = vset.pattern.permute.xlu0 %v59
  %62 = vperm.xlu0 %61, %v57
  %v63 = vpop.permute.xlu0 %62
  %v64 = vperm.slane %v25, 5
  %v65 = vlaneseq
  %v66 = vshrl.u32 %v65, 7
  %68 = vset.pattern.permute.xlu0 %v66
  %69 = vperm.xlu0 %68, %v64
  %v70 = vpop.permute.xlu0 %69
  %v71 = vperm.slane %v25, 6
  %v72 = vlaneseq
  %v73 = vshrl.u32 %v72, 7
  %75 = vset.pattern.permute.xlu0 %v73
  %76 = vperm.xlu0 %75, %v71
  %v77 = vpop.permute.xlu0 %76
  %v78 = vperm.slane %v25, 7
  %v79 = vlaneseq
  %v80 = vshrl.u32 %v79, 7
  %82 = vset.pattern.permute.xlu0 %v80
  %83 = vperm.xlu0 %82, %v78
  %v84 = vpop.permute.xlu0 %83
  %vm85 = vcmp.eq.s32.totalorder %v28, %v35
  %vm86 = vcmp.eq.s32.totalorder %v28, %v42
  %vm87 = vcmp.eq.s32.totalorder %v28, %v49
  %vm88 = vcmp.eq.s32.totalorder %v28, %v56
  %vm89 = vcmp.eq.s32.totalorder %v28, %v63
  %vm90 = vcmp.eq.s32.totalorder %v28, %v70
  %vm91 = vcmp.eq.s32.totalorder %v28, %v77
  %vm92 = vcmp.eq.s32.totalorder %v28, %v84
  %v93 = vsel %vm85, %v17, 0.0
  %v94 = vsel %vm86, %v18, 0.0
  %v95 = vsel %vm87, %v19, 0.0
  %v96 = vsel %vm88, %v20, 0.0
  %v97 = vsel %vm89, %v21, 0.0
  %v98 = vsel %vm90, %v22, 0.0
  %v99 = vsel %vm91, %v23, 0.0
  %v100 = vsel %vm92, %v24, 0.0
  %vm101 = vcmask 261120
  %v102 = vsel %vm101, %v93, 0.0
  %103 = vadd.xlane.f32.xlu0 %v102
  %v104 = vpop.xlane.xlu0 %103
  %v105 = vsel %vm101, %v94, 0.0
  %106 = vadd.xlane.f32.xlu0 %v105
  %v107 = vpop.xlane.xlu0 %106
  %v108 = vsel %vm101, %v95, 0.0
  %109 = vadd.xlane.f32.xlu0 %v108
  %v110 = vpop.xlane.xlu0 %109
  %v111 = vsel %vm101, %v96, 0.0
  %112 = vadd.xlane.f32.xlu0 %v111
  %v113 = vpop.xlane.xlu0 %112
  %v114 = vsel %vm101, %v97, 0.0
  %115 = vadd.xlane.f32.xlu0 %v114
  %v116 = vpop.xlane.xlu0 %115
  %v117 = vsel %vm101, %v98, 0.0
  %118 = vadd.xlane.f32.xlu0 %v117
  %v119 = vpop.xlane.xlu0 %118
  %v120 = vsel %vm101, %v99, 0.0
  %121 = vadd.xlane.f32.xlu0 %v120
  %v122 = vpop.xlane.xlu0 %121
  %v123 = vsel %vm101, %v100, 0.0
  %124 = vadd.xlane.f32.xlu0 %v123
  %v125 = vpop.xlane.xlu0 %124
  %vm126 = vcmp.gt.f32.partialorder %v104, 0.0
  %vm127 = vcmp.gt.f32.partialorder %v107, 0.0
  %vm128 = vcmp.gt.f32.partialorder %v110, 0.0
  %vm129 = vcmp.gt.f32.partialorder %v113, 0.0
  %vm130 = vcmp.gt.f32.partialorder %v116, 0.0
  %vm131 = vcmp.gt.f32.partialorder %v119, 0.0
  %vm132 = vcmp.gt.f32.partialorder %v122, 0.0
  %vm133 = vcmp.gt.f32.partialorder %v125, 0.0
  %v134 = vlaneseq
  %v135 = vshrl.u32 %v134, 7
  %137 = vset.pattern.permute.xlu0 %v135
  %138 = vperm.xlu0 %137, %v28
  %v139 = vpop.permute.xlu0 %138
  %v140 = vsel %vm126, %v139, 4294967295
  %v141 = vsel %vm127, %v139, 4294967295
  %v142 = vsel %vm128, %v139, 4294967295
  %v143 = vsel %vm129, %v139, 4294967295
  %v144 = vsel %vm130, %v139, 4294967295
  %v145 = vsel %vm131, %v139, 4294967295
  %v146 = vsel %vm132, %v139, 4294967295
  %v147 = vsel %vm133, %v139, 4294967295
  %148 = vset.pattern.permute.xlu0 0
  %149 = vperm.xlu0 %148, %v140
  %v150 = vpop.permute.xlu0 %149
  %151 = vset.pattern.permute.xlu0 0
  %152 = vperm.xlu0 %151, %v141
  %v153 = vpop.permute.xlu0 %152
  %154 = vset.pattern.permute.xlu0 0
  %155 = vperm.xlu0 %154, %v142
  %v156 = vpop.permute.xlu0 %155
  %157 = vset.pattern.permute.xlu0 0
  %158 = vperm.xlu0 %157, %v143
  %v159 = vpop.permute.xlu0 %158
  %160 = vset.pattern.permute.xlu0 0
  %161 = vperm.xlu0 %160, %v144
  %v162 = vpop.permute.xlu0 %161
  %163 = vset.pattern.permute.xlu0 0
  %164 = vperm.xlu0 %163, %v145
  %v165 = vpop.permute.xlu0 %164
  %166 = vset.pattern.permute.xlu0 0
  %167 = vperm.xlu0 %166, %v146
  %v168 = vpop.permute.xlu0 %167
  %169 = vset.pattern.permute.xlu0 0
  %170 = vperm.xlu0 %169, %v147
  %v171 = vpop.permute.xlu0 %170
  %v172 = vperm.slane %v150, %v28
  %v173 = vperm.slane %v153, %v28
  %v174 = vperm.slane %v156, %v28
  %v175 = vperm.slane %v159, %v28
  %v176 = vperm.slane %v162, %v28
  %v177 = vperm.slane %v165, %v28
  %v178 = vperm.slane %v168, %v28
  %v179 = vperm.slane %v171, %v28
  %vm180 = vcmask 1041409
  %v181 = vsel %vm180, %v173, %v172
  %vm182 = vcmask 1042434
  %v183 = vsel %vm182, %v174, %v181
  %vm184 = vcmask 1043459
  %v185 = vsel %vm184, %v175, %v183
  %vm186 = vcmask 1044484
  %v187 = vsel %vm186, %v176, %v185
  %vm188 = vcmask 1045509
  %v189 = vsel %vm188, %v177, %v187
  %vm190 = vcmask 1046534
  %v191 = vsel %vm190, %v178, %v189
  %vm192 = vcmask 1047559
  %v193 = vsel %vm192, %v179, %v191
  %vm194 = vcmask 64512
  %v195 = vsel %vm194, %v193, 2147483648
  %v196 = vand.u32 %v195, 65535
  %v197 = vshra.s32 %v195, 16
  %v198 = vcvt.s32.f32 %v196
  %v199 = vcvt.s32.f32 %v197
  %200 = vmax.xlane.f32.xlu0 %v199
  %v201 = vpop.xlane.xlu0 %200
  %vm202 = vcmp.eq.f32.partialorder %v199, %v201
  %v203 = vsel %vm202, %v198, -inf
  %204 = vmax.xlane.f32.xlu0 %v203
  %v205 = vpop.xlane.xlu0 %204
  %v206 = vcvt.f32.s32 %v205
  %v207 = vcvt.f32.s32 %v201
  %v208 = vshll.u32 %v207, 16
  %v209 = vadd.s32 %v208, %v206
  %vm210 = vcmp.ge.s32.totalorder %v209, 0
  %v211 = vadd.s32 %v209, 1
  %v212 = vsel %vm210, %v211, 7
  %vm213 = vcmp.lt.s32.totalorder %v28, %v212
  %v214 = vsel %vm213, 1, 0
  %v215 = vcvt.s32.f32 %v214
  %v216 = vlog2.pop %v104
  %v217 = vmul.f32 %v216, 0.6931472
  %v218 = vlog2.pop %v107
  %v219 = vmul.f32 %v218, 0.6931472
  %v220 = vlog2.pop %v110
  %v221 = vmul.f32 %v220, 0.6931472
  %v222 = vlog2.pop %v113
  %v223 = vmul.f32 %v222, 0.6931472
  %v224 = vlog2.pop %v116
  %v225 = vmul.f32 %v224, 0.6931472
  %v226 = vlog2.pop %v119
  %v227 = vmul.f32 %v226, 0.6931472
  %v228 = vlog2.pop %v122
  %v229 = vmul.f32 %v228, 0.6931472
  %v230 = vlog2.pop %v125
  %v231 = vmul.f32 %v230, 0.6931472
  %v232 = vmax.f32 %v217, -100.0
  %v233 = vmax.f32 %v219, -100.0
  %v234 = vmax.f32 %v221, -100.0
  %v235 = vmax.f32 %v223, -100.0
  %v236 = vmax.f32 %v225, -100.0
  %v237 = vmax.f32 %v227, -100.0
  %v238 = vmax.f32 %v229, -100.0
  %v239 = vmax.f32 %v231, -100.0
  %v240 = vsub.f32 1.0, %v104
  %v241 = vsub.f32 1.0, %v107
  %v242 = vsub.f32 1.0, %v110
  %v243 = vsub.f32 1.0, %v113
  %v244 = vsub.f32 1.0, %v116
  %v245 = vsub.f32 1.0, %v119
  %v246 = vsub.f32 1.0, %v122
  %v247 = vsub.f32 1.0, %v125
  %v248 = vlog2.pop %v240
  %v249 = vmul.f32 %v248, 0.6931472
  %v250 = vlog2.pop %v241
  %v251 = vmul.f32 %v250, 0.6931472
  %v252 = vlog2.pop %v242
  %v253 = vmul.f32 %v252, 0.6931472
  %v254 = vlog2.pop %v243
  %v255 = vmul.f32 %v254, 0.6931472
  %v256 = vlog2.pop %v244
  %v257 = vmul.f32 %v256, 0.6931472
  %v258 = vlog2.pop %v245
  %v259 = vmul.f32 %v258, 0.6931472
  %v260 = vlog2.pop %v246
  %v261 = vmul.f32 %v260, 0.6931472
  %v262 = vlog2.pop %v247
  %v263 = vmul.f32 %v262, 0.6931472
  %v264 = vmax.f32 %v249, -100.0
  %v265 = vmax.f32 %v251, -100.0
  %v266 = vmax.f32 %v253, -100.0
  %v267 = vmax.f32 %v255, -100.0
  %v268 = vmax.f32 %v257, -100.0
  %v269 = vmax.f32 %v259, -100.0
  %v270 = vmax.f32 %v261, -100.0
  %v271 = vmax.f32 %v263, -100.0
  %v280 = vperm.slane %v232, %v28
  %v281 = vperm.slane %v233, %v28
  %v282 = vperm.slane %v234, %v28
  %v283 = vperm.slane %v235, %v28
  %v284 = vperm.slane %v236, %v28
  %v285 = vperm.slane %v237, %v28
  %v286 = vperm.slane %v238, %v28
  %v287 = vperm.slane %v239, %v28
  %v288 = vsel %vm180, %v281, %v280
  %v289 = vsel %vm182, %v282, %v288
  %v290 = vsel %vm184, %v283, %v289
  %v291 = vsel %vm186, %v284, %v290
  %v292 = vsel %vm188, %v285, %v291
  %v293 = vsel %vm190, %v286, %v292
  %v294 = vsel %vm192, %v287, %v293
  %v296 = vmul.f32 %v26, %v294
  %v297 = vsub.f32 1.0, %v26
  %v306 = vperm.slane %v264, %v28
  %v307 = vperm.slane %v265, %v28
  %v308 = vperm.slane %v266, %v28
  %v309 = vperm.slane %v267, %v28
  %v310 = vperm.slane %v268, %v28
  %v311 = vperm.slane %v269, %v28
  %v312 = vperm.slane %v270, %v28
  %v313 = vperm.slane %v271, %v28
  %v314 = vsel %vm180, %v307, %v306
  %v315 = vsel %vm182, %v308, %v314
  %v316 = vsel %vm184, %v309, %v315
  %v317 = vsel %vm186, %v310, %v316
  %v318 = vsel %vm188, %v311, %v317
  %v319 = vsel %vm190, %v312, %v318
  %v320 = vsel %vm192, %v313, %v319
  %v322 = vmul.f32 %v297, %v320
  %v323 = vadd.f32 %v296, %v322
  %v324 = vsub.f32 0.0, %v323
  %v325 = vmul.f32 %v324, %v215
  %v326 = vsel %vm194, %v325, 0.0
  %327 = vadd.xlane.f32.xlu0 %v326
  %v328 = vpop.xlane.xlu0 %327
  %v329 = vsel %vm194, %v215, 0.0
  %330 = vadd.xlane.f32.xlu0 %v329
  %v331 = vpop.xlane.xlu0 %330
  %v332 = vrcp.pop %v331
  %v333 = vmul.f32 %v331, %v332
  %v334 = vsub.f32 1.0, %v333
  %v335 = vmul.f32 %v332, %v334
  %v336 = vadd.f32 %v332, %v335
  %vm337 = vweird.f32 %v331
  %vm338 = vweird.f32 %v332
  %vm339 = vmor %vm337, %vm338
  %v340 = vsel %vm339, %v332, %v336
  %v341 = vand.u32 2147483647, %v331
  %vm342 = vcmp.eq.f32.partialorder %v341, 8.507059e+37
  %v343 = vand.u32 %v331, 2147483648
  %v344 = vor.u32 1.1754944e-38, %v343
  %v345 = vsel %vm342, %v344, %v340
  %v346 = vmul.f32 %v328, %v345
  %v355 = vperm.slane %v104, %v28
  %v356 = vperm.slane %v107, %v28
  %v357 = vperm.slane %v110, %v28
  %v358 = vperm.slane %v113, %v28
  %v359 = vperm.slane %v116, %v28
  %v360 = vperm.slane %v119, %v28
  %v361 = vperm.slane %v122, %v28
  %v362 = vperm.slane %v125, %v28
  %v363 = vsel %vm180, %v356, %v355
  %v364 = vsel %vm182, %v357, %v363
  %v365 = vsel %vm184, %v358, %v364
  %v366 = vsel %vm186, %v359, %v365
  %v367 = vsel %vm188, %v360, %v366
  %v368 = vsel %vm190, %v361, %v367
  %v369 = vsel %vm192, %v362, %v368
  %371 = vst.msk [vmem:[%s3] sm:$0xff] %vm194, %v369
  %372 = vst.msk [vmem:[%s4] sm:$0xff] %vm194, %v215
  %vm373 = vcmask 7168
  %374 = vst.msk [vmem:[%s5] sm:$0xff] %vm373, %v346
  // Predicated region
  $region14: #{dkt_loss_pallas.1} parent=0 // pred_check
    _
  $region15: #{dkt_loss_pallas.1} parent=0 // pred_check_branch
    %376 = sbr.rel (0) target = $region17
  $region16: #{dkt_loss_pallas.1} parent=0 // pred_region
    _
  $region17: #{dkt_loss_pallas.1} parent=0 // pred_fallthru
    _
  // Predicated region
  $region18: #{dkt_loss_pallas.1} parent=0 // pred_check
    _
  $region19: #{dkt_loss_pallas.1} parent=0 // pred_check_branch
    %378 = sbr.rel (0) target = $region21
  $region20: #{dkt_loss_pallas.1} parent=0 // pred_region
    _
  $region21: #{dkt_loss_pallas.1} parent=0 // pred_fallthru
    _
  // Predicated region
  $region22: #{dkt_loss_pallas.1} parent=0 // pred_check
    _
  $region23: #{dkt_loss_pallas.1} parent=0 // pred_check_branch
    %380 = sbr.rel (0) target = $region25
  $region24: #{dkt_loss_pallas.1} parent=0 // pred_region
    _
  $region25: #{dkt_loss_pallas.1} parent=0 // pred_fallthru
    _
  // Predicated region
  $region26: #{dkt_loss_pallas.1} parent=0 // pred_check
    _
  $region27: #{dkt_loss_pallas.1} parent=0 // pred_check_branch
    %382 = sbr.rel (0) target = $region29
  $region28: #{dkt_loss_pallas.1} parent=0 // pred_region
    _
  $region29: #{dkt_loss_pallas.1} parent=0 // pred_fallthru
    _
  // Predicated region
  $region30: #{dkt_loss_pallas.1} parent=0 // pred_check
    _
  $region31: #{dkt_loss_pallas.1} parent=0 // pred_check_branch
    %384 = sbr.rel (0) target = $region33
  $region32: #{dkt_loss_pallas.1} parent=0 // pred_region
    _
  $region33: #{dkt_loss_pallas.1} parent=0 // pred_fallthru
    _
  // Predicated region
  $region34: #{dkt_loss_pallas.1} parent=0 // pred_check
    _
  $region35: #{dkt_loss_pallas.1} parent=0 // pred_check_branch
    %386 = sbr.rel (0) target = $region37
  $region36: #{dkt_loss_pallas.1} parent=0 // pred_region
    _
  $region37: #{dkt_loss_pallas.1} parent=0 // pred_fallthru
    _

</llo_original>
